<compile_context>
chip_gen: v7x
topology: tpu7x:2x2x1
jax: 0.10.0
libtpu: 0.0.40
codegen_flags: <defaults>
</compile_context>

<pallas_src>
import jax
import jax.numpy as jnp
from jax.experimental import pallas as pl
from jax.experimental.pallas import tpu as pltpu

IN_DIM = 28 * 28      # 784  (already a multiple of 8 for sublane tiling; 784 = 6*128 + 16)
HID_DIM = 64
PAD_HID = 128         # lane-dense hidden dim for the MXU (zero padding is inert)
MAX_TILE_B = 512      # rows per grid step; safe on v7x (64 MiB/TC), fine on v5e/v6e


def _round_up(x, m):
    return ((x + m - 1) // m) * m


def _choose_tile_b(B):
    """Pick a batch tile: small batches -> one full block; large batches -> a
    multiple-of-8 tile capped at MAX_TILE_B so the grid has ~8 pipelined steps."""
    if B <= 64:
        return B  # single block; legal because block dim == full array dim
    t = _round_up(pl.cdiv(B, 8), 8)   # aim for ~8 grid steps
    return max(8, min(MAX_TILE_B, t))


def autoencoder_kernel(x_ref, w1_ref, b1_ref, w2_ref, b2_ref, o_ref):
    # x_ref:  (tile_b, 784)   flattened input tile (no feature padding)
    # w1_ref: (784, 128), b1_ref: (1, 128)   hidden dim zero-padded 64 -> 128
    # w2_ref: (128, 784), b2_ref: (1, 784)
    # o_ref:  (tile_b, 784)
    x = x_ref[...]

    # Encoder: Linear(784 -> 64) + ReLU (hidden padded to 128; padded lanes stay 0).
    h = jnp.dot(x, w1_ref[...], preferred_element_type=jnp.float32) + b1_ref[...]
    h = jnp.maximum(h, 0.0)

    # Decoder: Linear(64 -> 784) + Sigmoid (padded w2 rows are zero -> inert).
    y = jnp.dot(h, w2_ref[...], preferred_element_type=jnp.float32) + b2_ref[...]
    # Exact sigmoid: exp rides the EUP slot; the divide is free on a mem-bound kernel.
    o_ref[...] = (1.0 / (1.0 + jnp.exp(-y))).astype(o_ref.dtype)


def autoencoder_forward(x_nchw, w1, b1, w2, b2):
    """x_nchw: (B, 1, 28, 28) float32 -> (B, 1, 28, 28) float32."""
    B = x_nchw.shape[0]
    x_flat = x_nchw.reshape(B, IN_DIM)                       # nn.Flatten()

    # Zero-pad only the hidden dim of the weights/biases (64 -> 128).
    # Zero columns/rows contribute exact zeros, so real lanes are unchanged.
    w1_p = jnp.pad(w1, ((0, 0), (0, PAD_HID - HID_DIM)))     # (784, 128)
    b1_p = jnp.pad(b1, ((0, 0), (0, PAD_HID - HID_DIM)))     # (1, 128)
    w2_p = jnp.pad(w2, ((0, PAD_HID - HID_DIM), (0, 0)))     # (128, 784)
    # b2 stays (1, 784).

    tile_b = _choose_tile_b(B)
    grid = (pl.cdiv(B, tile_b),)

    out = pl.pallas_call(
        autoencoder_kernel,
        out_shape=jax.ShapeDtypeStruct((B, IN_DIM), jnp.float32),
        grid_spec=pltpu.PrefetchScalarGridSpec(
            num_scalar_prefetch=0,
            grid=grid,
            in_specs=[
                pl.BlockSpec((tile_b, IN_DIM), lambda i: (i, 0)),    # x tile
                pl.BlockSpec((IN_DIM, PAD_HID), lambda i: (0, 0)),   # w1
                pl.BlockSpec((1, PAD_HID), lambda i: (0, 0)),        # b1
                pl.BlockSpec((PAD_HID, IN_DIM), lambda i: (0, 0)),   # w2
                pl.BlockSpec((1, IN_DIM), lambda i: (0, 0)),         # b2
            ],
            out_specs=pl.BlockSpec((tile_b, IN_DIM), lambda i: (i, 0)),
        ),
        compiler_params=pltpu.CompilerParams(
            dimension_semantics=("parallel",),        # batch axis is embarrassingly parallel
            vmem_limit_bytes=32 * 1024 * 1024,        # plenty for 512-row f32 tiles + weights
        ),
    )(x_flat, w1_p, b1_p, w2_p, b2)

    # nn.Unflatten(1, (1, 28, 28)) — no padding to slice off anymore.
    return out.reshape(B, 1, 28, 28)


def init_params(key):
    """PyTorch nn.Linear default init U(-1/sqrt(fan_in), +1/sqrt(fan_in)).
    Weights stored transposed relative to PyTorch: (in, out), so kernel does x @ W."""
    k1, k2, k3, k4 = jax.random.split(key, 4)
    bound1 = 1.0 / jnp.sqrt(jnp.float32(IN_DIM))
    bound2 = 1.0 / jnp.sqrt(jnp.float32(HID_DIM))
    w1 = jax.random.uniform(k1, (IN_DIM, HID_DIM), jnp.float32, -bound1, bound1)
    b1 = jax.random.uniform(k2, (1, HID_DIM), jnp.float32, -bound1, bound1)
    w2 = jax.random.uniform(k3, (HID_DIM, IN_DIM), jnp.float32, -bound2, bound2)
    b2 = jax.random.uniform(k4, (1, IN_DIM), jnp.float32, -bound2, bound2)
    return w1, b1, w2, b2


if __name__ == "__main__":
    key = jax.random.PRNGKey(0)
    k_params, k_x = jax.random.split(key)

    w1, b1, w2, b2 = init_params(k_params)

    B = 2
    x = jax.random.uniform(k_x, (B, 1, 28, 28), jnp.float32)  # MNIST-like NCHW input

    out = autoencoder_forward(x, w1, b1, w2, b2)
    out = jax.block_until_ready(out)

    # Reference check against plain JAX (exact sigmoid -> tight tolerance).
    x_flat = x.reshape(B, IN_DIM)
    h_ref = jnp.maximum(x_flat @ w1 + b1, 0.0)
    y_ref = jax.nn.sigmoid(h_ref @ w2 + b2).reshape(B, 1, 28, 28)
    assert out.shape == (B, 1, 28, 28)
    assert jnp.allclose(out, y_ref, atol=1e-5), "mismatch vs JAX reference"

    print("KERNEL_OK")
</pallas_src>

<mosaic_0001>
module attributes {stable_mosaic.version = 11 : i64} {
  func.func @autoencoder_kernel(%arg0: i32, %arg1: memref<2x784xf32, #tpu.memory_space<vmem>>, %arg2: memref<784x128xf32, #tpu.memory_space<vmem>>, %arg3: memref<1x128xf32, #tpu.memory_space<vmem>>, %arg4: memref<128x784xf32, #tpu.memory_space<vmem>>, %arg5: memref<1x784xf32, #tpu.memory_space<vmem>>, %arg6: memref<2x784xf32, #tpu.memory_space<vmem>>) attributes {dimension_semantics = [#tpu.dimension_semantics<parallel>], iteration_bounds = array<i64: 1>, scalar_prefetch = 0 : i64, scratch_operands = 0 : i64, tpu.core_type = #tpu.core_type<tc>, window_params = [{transform_indices = @transform_0, window_bounds = array<i64: 2, 784>}, {pipeline_mode = #tpu.pipeline_mode<synchronous>, transform_indices = @transform_1, window_bounds = array<i64: 784, 128>}, {pipeline_mode = #tpu.pipeline_mode<synchronous>, transform_indices = @transform_2, window_bounds = array<i64: 1, 128>}, {pipeline_mode = #tpu.pipeline_mode<synchronous>, transform_indices = @transform_3, window_bounds = array<i64: 128, 784>}, {pipeline_mode = #tpu.pipeline_mode<synchronous>, transform_indices = @transform_4, window_bounds = array<i64: 1, 784>}, {transform_indices = @transform_5, window_bounds = array<i64: 2, 784>}]} {
    %c0 = arith.constant 0 : index
    %c0_0 = arith.constant 0 : index
    %0 = vector.load %arg1[%c0, %c0_0] : memref<2x784xf32, #tpu.memory_space<vmem>>, vector<2x784xf32>
    %c0_1 = arith.constant 0 : index
    %c0_2 = arith.constant 0 : index
    %1 = vector.load %arg2[%c0_1, %c0_2] : memref<784x128xf32, #tpu.memory_space<vmem>>, vector<784x128xf32>
    %cst = arith.constant dense<0.000000e+00> : vector<2x128xf32>
    %2 = tpu.matmul %0, %1, %cst {dimension_numbers = #tpu.dot_dimension_numbers<[1], [0], [0], [1], [0, 0, 1, 1], [], []>} : vector<2x784xf32>, vector<784x128xf32>, vector<2x128xf32> -> vector<2x128xf32>
    %c0_3 = arith.constant 0 : index
    %c0_4 = arith.constant 0 : index
    %3 = vector.load %arg3[%c0_3, %c0_4] : memref<1x128xf32, #tpu.memory_space<vmem>>, vector<1x128xf32>
    %4 = vector.broadcast %3 : vector<1x128xf32> to vector<2x128xf32>
    %5 = arith.addf %2, %4 : vector<2x128xf32>
    %cst_5 = arith.constant 0.000000e+00 : f32
    %6 = vector.broadcast %cst_5 : f32 to vector<2x128xf32>
    %7 = arith.maximumf %5, %6 : vector<2x128xf32>
    %c0_6 = arith.constant 0 : index
    %c0_7 = arith.constant 0 : index
    %8 = vector.load %arg4[%c0_6, %c0_7] : memref<128x784xf32, #tpu.memory_space<vmem>>, vector<128x784xf32>
    %cst_8 = arith.constant dense<0.000000e+00> : vector<2x784xf32>
    %9 = tpu.matmul %7, %8, %cst_8 {dimension_numbers = #tpu.dot_dimension_numbers<[1], [0], [0], [1], [0, 0, 1, 1], [], []>} : vector<2x128xf32>, vector<128x784xf32>, vector<2x784xf32> -> vector<2x784xf32>
    %c0_9 = arith.constant 0 : index
    %c0_10 = arith.constant 0 : index
    %10 = vector.load %arg5[%c0_9, %c0_10] : memref<1x784xf32, #tpu.memory_space<vmem>>, vector<1x784xf32>
    %11 = vector.broadcast %10 : vector<1x784xf32> to vector<2x784xf32>
    %12 = arith.addf %9, %11 : vector<2x784xf32>
    %cst_11 = arith.constant 0.000000e+00 : f32
    %13 = vector.broadcast %cst_11 : f32 to vector<2x784xf32>
    %14 = arith.subf %13, %12 : vector<2x784xf32>
    %15 = math.exp %14 : vector<2x784xf32>
    %cst_12 = arith.constant 1.000000e+00 : f32
    %16 = vector.broadcast %cst_12 : f32 to vector<2x784xf32>
    %17 = arith.addf %16, %15 : vector<2x784xf32>
    %cst_13 = arith.constant 1.000000e+00 : f32
    %18 = vector.broadcast %cst_13 : f32 to vector<2x784xf32>
    %19 = arith.divf %18, %17 : vector<2x784xf32>
    %c0_14 = arith.constant 0 : index
    %c0_15 = arith.constant 0 : index
    %20 = vector.load %arg6[%c0_14, %c0_15] : memref<2x784xf32, #tpu.memory_space<vmem>>, vector<2x784xf32>
    tpu.vector_store %arg6[%c0_14, %c0_15], %19 {strides = array<i32>} : memref<2x784xf32, #tpu.memory_space<vmem>>, vector<2x784xf32>,
    return
  }
  func.func @transform_0(%arg0: i32) -> (i32, i32) {
    %c0_i32 = arith.constant 0 : i32
    %c0_i32_0 = arith.constant 0 : i32
    return %arg0, %c0_i32 : i32, i32
  }
  func.func @transform_1(%arg0: i32) -> (i32, i32) {
    %c0_i32 = arith.constant 0 : i32
    %c0_i32_0 = arith.constant 0 : i32
    %c0_i32_1 = arith.constant 0 : i32
    return %c0_i32, %c0_i32_0 : i32, i32
  }
  func.func @transform_2(%arg0: i32) -> (i32, i32) {
    %c0_i32 = arith.constant 0 : i32
    %c0_i32_0 = arith.constant 0 : i32
    %c0_i32_1 = arith.constant 0 : i32
    return %c0_i32, %c0_i32_0 : i32, i32
  }
  func.func @transform_3(%arg0: i32) -> (i32, i32) {
    %c0_i32 = arith.constant 0 : i32
    %c0_i32_0 = arith.constant 0 : i32
    %c0_i32_1 = arith.constant 0 : i32
    return %c0_i32, %c0_i32_0 : i32, i32
  }
  func.func @transform_4(%arg0: i32) -> (i32, i32) {
    %c0_i32 = arith.constant 0 : i32
    %c0_i32_0 = arith.constant 0 : i32
    %c0_i32_1 = arith.constant 0 : i32
    return %c0_i32, %c0_i32_0 : i32, i32
  }
  func.func @transform_5(%arg0: i32) -> (i32, i32) {
    %c0_i32 = arith.constant 0 : i32
    %c0_i32_0 = arith.constant 0 : i32
    return %arg0, %c0_i32 : i32, i32
  }
}

</mosaic_0001>

<llo_original>
// kernel: tpu_custom_call.1
$region0: #{tpu_custom_call.1}
  #allocation0 [shape = 'u32[]', space=smem, size = 0x4, offset = 0x4, fixed_abs, tag = 'smem constant byte address 0x4 - core index']
  #allocation1 [shape = 'u32[144,128]{1,0:T(1,128)}', space=vmem, size = 0x12000, scoped, tag = 'internal scratch']
  %s0 = inlined_call_operand.vmem [shape: f32[2,784], index: 0, kind: input, shape index: {}]
  %s1 = inlined_call_operand.vmem [shape: f32[784,128], index: 1, kind: input, shape index: {}]
  %s2 = inlined_call_operand.vmem [shape: f32[1,128], index: 2, kind: input, shape index: {}]
  %s3 = inlined_call_operand.vmem [shape: f32[128,784], index: 3, kind: input, shape index: {}]
  %s4 = inlined_call_operand.vmem [shape: f32[1,784], index: 4, kind: input, shape index: {}]
  %s5 = inlined_call_operand.hbm [shape: f32[2,784], index: 5, kind: output, shape index: {}]
  %s6 = sld [smem:[#allocation0]]
  $region30: #{tpu_custom_call.1} parent=0
    _
  %s8 = ssub.s32 1, %s6
  %s9 = scalar_select 0, %s8, %s6
  $region1: #{tpu_custom_call.1} parent=0
    #allocation2 [shape = 'u8[7168]{0}', space=vmem, size = 0x1c00, scoped, tag = 'output window, operand 0, single buffered']
    #allocation3 [shape = 's32[1]{0}', space=sflag, size = 0x4, scoped, tag = 'scoped memory for tpu_custom_call.1']
    %10 = vsyncpa [#allocation3], 0
    // Predicated region
    $region2: #{tpu_custom_call.1} parent=1 // pred_check
      _
    $region3: #{tpu_custom_call.1} parent=1 // pred_check_branch
      %12 = sbr.rel (0) target = $region5
    $region4: #{tpu_custom_call.1} parent=1 // pred_region
      _
    $region5: #{tpu_custom_call.1} parent=1 // pred_fallthru
      _
    // Predicated region
    $region6: #{tpu_custom_call.1} parent=1 // pred_check
      _
    $region7: #{tpu_custom_call.1} parent=1 // pred_check_branch
      %14 = sbr.rel (0) target = $region9
    $region8: #{tpu_custom_call.1} parent=1 // pred_region
      _
    $region9: #{tpu_custom_call.1} parent=1 // pred_fallthru
      _
    // Predicated region
    $region10: #{tpu_custom_call.1} parent=1 // pred_check
      _
    $region11: #{tpu_custom_call.1} parent=1 // pred_check_branch
      %16 = sbr.rel (0) target = $region13
    $region12: #{tpu_custom_call.1} parent=1 // pred_region
      _
    $region13: #{tpu_custom_call.1} parent=1 // pred_fallthru
      _
    // Predicated region
    $region14: #{tpu_custom_call.1} parent=1 // pred_check
      _
    $region15: #{tpu_custom_call.1} parent=1 // pred_check_branch
      %18 = sbr.rel (0) target = $region17
    $region16: #{tpu_custom_call.1} parent=1 // pred_region
      _
    $region17: #{tpu_custom_call.1} parent=1 // pred_fallthru
      _
    // Predicated region
    $region18: #{tpu_custom_call.1} parent=1 // pred_check
      _
    $region19: #{tpu_custom_call.1} parent=1 // pred_check_branch
      %20 = sbr.rel (0) target = $region21
    $region20: #{tpu_custom_call.1} parent=1 // pred_region
      _
    $region21: #{tpu_custom_call.1} parent=1 // pred_fallthru
      _
    %v21 = vld [vmem:[%s0] sm:$0xff]
    %v22 = vld [vmem:[%s0 + $0x8] sm:$0x3f]
    %v23 = vld [vmem:[%s1] sm:$0xff]
    %v24 = vld [vmem:[%s1 + $0x8] sm:$0xff]
    %v25 = vld [vmem:[%s1 + $0x10] sm:$0xff]
    %v26 = vld [vmem:[%s1 + $0x18] sm:$0xff]
    %v27 = vld [vmem:[%s1 + $0x20] sm:$0xff]
    %v28 = vld [vmem:[%s1 + $0x28] sm:$0xff]
    %v29 = vld [vmem:[%s1 + $0x30] sm:$0xff]
    %v30 = vld [vmem:[%s1 + $0x38] sm:$0xff]
    %v31 = vld [vmem:[%s1 + $0x40] sm:$0xff]
    %v32 = vld [vmem:[%s1 + $0x48] sm:$0xff]
    %v33 = vld [vmem:[%s1 + $0x50] sm:$0xff]
    %v34 = vld [vmem:[%s1 + $0x58] sm:$0xff]
    %v35 = vld [vmem:[%s1 + $0x60] sm:$0xff]
    %v36 = vld [vmem:[%s1 + $0x68] sm:$0xff]
    %v37 = vld [vmem:[%s1 + $0x70] sm:$0xff]
    %v38 = vld [vmem:[%s1 + $0x78] sm:$0xff]
    %v39 = vld [vmem:[%s1 + $0x80] sm:$0xff]
    %v40 = vld [vmem:[%s1 + $0x88] sm:$0xff]
    %v41 = vld [vmem:[%s1 + $0x90] sm:$0xff]
    %v42 = vld [vmem:[%s1 + $0x98] sm:$0xff]
    %v43 = vld [vmem:[%s1 + $0xa0] sm:$0xff]
    %v44 = vld [vmem:[%s1 + $0xa8] sm:$0xff]
    %v45 = vld [vmem:[%s1 + $0xb0] sm:$0xff]
    %v46 = vld [vmem:[%s1 + $0xb8] sm:$0xff]
    %v47 = vld [vmem:[%s1 + $0xc0] sm:$0xff]
    %v48 = vld [vmem:[%s1 + $0xc8] sm:$0xff]
    %v49 = vld [vmem:[%s1 + $0xd0] sm:$0xff]
    %v50 = vld [vmem:[%s1 + $0xd8] sm:$0xff]
    %v51 = vld [vmem:[%s1 + $0xe0] sm:$0xff]
    %v52 = vld [vmem:[%s1 + $0xe8] sm:$0xff]
    %v53 = vld [vmem:[%s1 + $0xf0] sm:$0xff]
    %v54 = vld [vmem:[%s1 + $0xf8] sm:$0xff]
    %v55 = vld [vmem:[%s1 + $0x100] sm:$0xff]
    %v56 = vld [vmem:[%s1 + $0x108] sm:$0xff]
    %v57 = vld [vmem:[%s1 + $0x110] sm:$0xff]
    %v58 = vld [vmem:[%s1 + $0x118] sm:$0xff]
    %v59 = vld [vmem:[%s1 + $0x120] sm:$0xff]
    %v60 = vld [vmem:[%s1 + $0x128] sm:$0xff]
    %v61 = vld [vmem:[%s1 + $0x130] sm:$0xff]
    %v62 = vld [vmem:[%s1 + $0x138] sm:$0xff]
    %v63 = vld [vmem:[%s1 + $0x140] sm:$0xff]
    %v64 = vld [vmem:[%s1 + $0x148] sm:$0xff]
    %v65 = vld [vmem:[%s1 + $0x150] sm:$0xff]
    %v66 = vld [vmem:[%s1 + $0x158] sm:$0xff]
    %v67 = vld [vmem:[%s1 + $0x160] sm:$0xff]
    %v68 = vld [vmem:[%s1 + $0x168] sm:$0xff]
    %v69 = vld [vmem:[%s1 + $0x170] sm:$0xff]
    %v70 = vld [vmem:[%s1 + $0x178] sm:$0xff]
    %v71 = vld [vmem:[%s1 + $0x180] sm:$0xff]
    %v72 = vld [vmem:[%s1 + $0x188] sm:$0xff]
    %v73 = vld [vmem:[%s1 + $0x190] sm:$0xff]
    %v74 = vld [vmem:[%s1 + $0x198] sm:$0xff]
    %v75 = vld [vmem:[%s1 + $0x1a0] sm:$0xff]
    %v76 = vld [vmem:[%s1 + $0x1a8] sm:$0xff]
    %v77 = vld [vmem:[%s1 + $0x1b0] sm:$0xff]
    %v78 = vld [vmem:[%s1 + $0x1b8] sm:$0xff]
    %v79 = vld [vmem:[%s1 + $0x1c0] sm:$0xff]
    %v80 = vld [vmem:[%s1 + $0x1c8] sm:$0xff]
    %v81 = vld [vmem:[%s1 + $0x1d0] sm:$0xff]
    %v82 = vld [vmem:[%s1 + $0x1d8] sm:$0xff]
    %v83 = vld [vmem:[%s1 + $0x1e0] sm:$0xff]
    %v84 = vld [vmem:[%s1 + $0x1e8] sm:$0xff]
    %v85 = vld [vmem:[%s1 + $0x1f0] sm:$0xff]
    %v86 = vld [vmem:[%s1 + $0x1f8] sm:$0xff]
    %v87 = vld [vmem:[%s1 + $0x200] sm:$0xff]
    %v88 = vld [vmem:[%s1 + $0x208] sm:$0xff]
    %v89 = vld [vmem:[%s1 + $0x210] sm:$0xff]
    %v90 = vld [vmem:[%s1 + $0x218] sm:$0xff]
    %v91 = vld [vmem:[%s1 + $0x220] sm:$0xff]
    %v92 = vld [vmem:[%s1 + $0x228] sm:$0xff]
    %v93 = vld [vmem:[%s1 + $0x230] sm:$0xff]
    %v94 = vld [vmem:[%s1 + $0x238] sm:$0xff]
    %v95 = vld [vmem:[%s1 + $0x240] sm:$0xff]
    %v96 = vld [vmem:[%s1 + $0x248] sm:$0xff]
    %v97 = vld [vmem:[%s1 + $0x250] sm:$0xff]
    %v98 = vld [vmem:[%s1 + $0x258] sm:$0xff]
    %v99 = vld [vmem:[%s1 + $0x260] sm:$0xff]
    %v100 = vld [vmem:[%s1 + $0x268] sm:$0xff]
    %v101 = vld [vmem:[%s1 + $0x270] sm:$0xff]
    %v102 = vld [vmem:[%s1 + $0x278] sm:$0xff]
    %v103 = vld [vmem:[%s1 + $0x280] sm:$0xff]
    %v104 = vld [vmem:[%s1 + $0x288] sm:$0xff]
    %v105 = vld [vmem:[%s1 + $0x290] sm:$0xff]
    %v106 = vld [vmem:[%s1 + $0x298] sm:$0xff]
    %v107 = vld [vmem:[%s1 + $0x2a0] sm:$0xff]
    %v108 = vld [vmem:[%s1 + $0x2a8] sm:$0xff]
    %v109 = vld [vmem:[%s1 + $0x2b0] sm:$0xff]
    %v110 = vld [vmem:[%s1 + $0x2b8] sm:$0xff]
    %v111 = vld [vmem:[%s1 + $0x2c0] sm:$0xff]
    %v112 = vld [vmem:[%s1 + $0x2c8] sm:$0xff]
    %v113 = vld [vmem:[%s1 + $0x2d0] sm:$0xff]
    %v114 = vld [vmem:[%s1 + $0x2d8] sm:$0xff]
    %v115 = vld [vmem:[%s1 + $0x2e0] sm:$0xff]
    %v116 = vld [vmem:[%s1 + $0x2e8] sm:$0xff]
    %v117 = vld [vmem:[%s1 + $0x2f0] sm:$0xff]
    %v118 = vld [vmem:[%s1 + $0x2f8] sm:$0xff]
    %v119 = vld [vmem:[%s1 + $0x300] sm:$0xff]
    %v120 = vld [vmem:[%s1 + $0x308] sm:$0xff]
    %v121 = vld [vmem:[%s2] sm:$0x1]
    %v123 = vlaneseq
    %v124 = vshrl.u32 %v123, 7
    %v125 = vsub.s32 0, %v124
    %v126 = vrot.slane %v121, %v125
    %v130 = vcombine.high %v21, %v21
    %v132 = vunpack.c.l.s4 1983009808
    %v133 = vunpack.c.0.s8 %v132
    %v134 = vlaneseq
    %v135 = vshrl.u32 %v134, 7
    %v136 = vsub.s32 %v133, %v135
    %v137 = vrot.slane %v21, %v136
    %v139 = vunpack.c.l.s4 1983009808
    %v140 = vunpack.c.0.s8 %v139
    %v141 = vlaneseq
    %v142 = vshrl.u32 %v141, 7
    %v143 = vsub.s32 %v140, %v142
    %v144 = vrot.slane %v130, %v143
    %v145 = vcombine.high %v137, %v137
    %v146 = vcombine.high %v144, %v144
    %v147 = vcombine.high %v22, %v22
    %v149 = vunpack.c.l.s4 1983009808
    %v150 = vunpack.c.0.s8 %v149
    %v151 = vlaneseq
    %v152 = vshrl.u32 %v151, 7
    %v153 = vsub.s32 %v150, %v152
    %v154 = vrot.slane %v22, %v153
    %v156 = vunpack.c.l.s4 1983009808
    %v157 = vunpack.c.0.s8 %v156
    %v158 = vlaneseq
    %v159 = vshrl.u32 %v158, 7
    %v160 = vsub.s32 %v157, %v159
    %v161 = vrot.slane %v147, %v160
    %v162 = vcombine.high %v154, %v154
    %vm169 = vcmask 130048
    %v170 = vsel %vm169, %v161, 0
    %172 = vmatprep.subr.mxu0 0.0
    %173 = vmatpush1.msra.mxu0 %v23
    %174 = vmatprep.subr.mxu0 0.0
    %175 = vmatpush1.msra.mxu0 %v24
    %176 = vmatprep.subr.mxu0 0.0
    %177 = vmatpush1.msra.mxu0 %v25
    %178 = vmatprep.subr.mxu0 0.0
    %179 = vmatpush1.msra.mxu0 %v26
    %180 = vmatprep.subr.mxu0 0.0
    %181 = vmatpush1.msra.mxu0 %v27
    %182 = vmatprep.subr.mxu0 0.0
    %183 = vmatpush1.msra.mxu0 %v28
    %184 = vmatprep.subr.mxu0 0.0
    %185 = vmatpush1.msra.mxu0 %v29
    %186 = vmatprep.subr.mxu0 0.0
    %187 = vmatpush1.msra.mxu0 %v30
    %188 = vmatprep.subr.mxu0 0.0
    %189 = vmatpush1.msra.mxu0 %v31
    %190 = vmatprep.subr.mxu0 0.0
    %191 = vmatpush1.msra.mxu0 %v32
    %192 = vmatprep.subr.mxu0 0.0
    %193 = vmatpush1.msra.mxu0 %v33
    %194 = vmatprep.subr.mxu0 0.0
    %195 = vmatpush1.msra.mxu0 %v34
    %196 = vmatprep.subr.mxu0 0.0
    %197 = vmatpush1.msra.mxu0 %v35
    %198 = vmatprep.subr.mxu0 0.0
    %199 = vmatpush1.msra.mxu0 %v36
    %200 = vmatprep.subr.mxu0 0.0
    %201 = vmatpush1.msra.mxu0 %v37
    %202 = vmatprep.subr.mxu0 0.0
    %203 = vmatpush1.msra.mxu0 %v38
    %204 = vmatprep.subr.mxu0 0.0
    %205 = vmatpush1.msra.mxu0 %v39
    %206 = vmatprep.subr.mxu0 0.0
    %207 = vmatpush1.msra.mxu0 %v40
    %208 = vmatprep.subr.mxu0 0.0
    %209 = vmatpush1.msra.mxu0 %v41
    %210 = vmatprep.subr.mxu0 0.0
    %211 = vmatpush1.msra.mxu0 %v42
    %212 = vmatprep.subr.mxu0 0.0
    %213 = vmatpush1.msra.mxu0 %v43
    %214 = vmatprep.subr.mxu0 0.0
    %215 = vmatpush1.msra.mxu0 %v44
    %216 = vmatprep.subr.mxu0 0.0
    %217 = vmatpush1.msra.mxu0 %v45
    %218 = vmatprep.subr.mxu0 0.0
    %219 = vmatpush1.msra.mxu0 %v46
    %220 = vmatprep.subr.mxu0 0.0
    %221 = vmatpush1.msra.mxu0 %v47
    %222 = vmatprep.subr.mxu0 0.0
    %223 = vmatpush1.msra.mxu0 %v48
    %224 = vmatprep.subr.mxu0 0.0
    %225 = vmatpush1.msra.mxu0 %v49
    %226 = vmatprep.subr.mxu0 0.0
    %227 = vmatpush1.msra.mxu0 %v50
    %228 = vmatprep.subr.mxu0 0.0
    %229 = vmatpush1.msra.mxu0 %v51
    %230 = vmatprep.subr.mxu0 0.0
    %231 = vmatpush1.msra.mxu0 %v52
    %232 = vmatprep.subr.mxu0 0.0
    %233 = vmatpush1.msra.mxu0 %v53
    %234 = vmatprep.subr.mxu0 0.0
    %235 = vmatpush1.msra.mxu0 %v54
    %236 = vmatprep.mubr.f32.mxu0 %v145
    %237 = vmatmul.mubr.f32.gmra.mrb[0].mxu0 %v137
    %v238 = vpop.f32.mrb[0].mxu0
    %v239 = vadd.f32 %v126, %v238
    %v240 = vpop.f32.mrb[0].mxu0
    %241 = vdwg.mxu0
    %242 = vmatprep.subr.mxu0 0.0
    %243 = vmatpush1.msra.mxu0 %v55
    %244 = vmatprep.subr.mxu0 0.0
    %245 = vmatpush1.msra.mxu0 %v56
    %246 = vmatprep.subr.mxu0 0.0
    %247 = vmatpush1.msra.mxu0 %v57
    %248 = vmatprep.subr.mxu0 0.0
    %249 = vmatpush1.msra.mxu0 %v58
    %250 = vmatprep.subr.mxu0 0.0
    %251 = vmatpush1.msra.mxu0 %v59
    %252 = vmatprep.subr.mxu0 0.0
    %253 = vmatpush1.msra.mxu0 %v60
    %254 = vmatprep.subr.mxu0 0.0
    %255 = vmatpush1.msra.mxu0 %v61
    %256 = vmatprep.subr.mxu0 0.0
    %257 = vmatpush1.msra.mxu0 %v62
    %258 = vmatprep.subr.mxu0 0.0
    %259 = vmatpush1.msra.mxu0 %v63
    %260 = vmatprep.subr.mxu0 0.0
    %261 = vmatpush1.msra.mxu0 %v64
    %262 = vmatprep.subr.mxu0 0.0
    %263 = vmatpush1.msra.mxu0 %v65
    %264 = vmatprep.subr.mxu0 0.0
    %265 = vmatpush1.msra.mxu0 %v66
    %266 = vmatprep.subr.mxu0 0.0
    %267 = vmatpush1.msra.mxu0 %v67
    %268 = vmatprep.subr.mxu0 0.0
    %269 = vmatpush1.msra.mxu0 %v68
    %270 = vmatprep.subr.mxu0 0.0
    %271 = vmatpush1.msra.mxu0 %v69
    %272 = vmatprep.subr.mxu0 0.0
    %273 = vmatpush1.msra.mxu0 %v70
    %274 = vmatprep.subr.mxu0 0.0
    %275 = vmatpush1.msra.mxu0 %v71
    %276 = vmatprep.subr.mxu0 0.0
    %277 = vmatpush1.msra.mxu0 %v72
    %278 = vmatprep.subr.mxu0 0.0
    %279 = vmatpush1.msra.mxu0 %v73
    %280 = vmatprep.subr.mxu0 0.0
    %281 = vmatpush1.msra.mxu0 %v74
    %282 = vmatprep.subr.mxu0 0.0
    %283 = vmatpush1.msra.mxu0 %v75
    %284 = vmatprep.subr.mxu0 0.0
    %285 = vmatpush1.msra.mxu0 %v76
    %286 = vmatprep.subr.mxu0 0.0
    %287 = vmatpush1.msra.mxu0 %v77
    %288 = vmatprep.subr.mxu0 0.0
    %289 = vmatpush1.msra.mxu0 %v78
    %290 = vmatprep.subr.mxu0 0.0
    %291 = vmatpush1.msra.mxu0 %v79
    %292 = vmatprep.subr.mxu0 0.0
    %293 = vmatpush1.msra.mxu0 %v80
    %294 = vmatprep.subr.mxu0 0.0
    %295 = vmatpush1.msra.mxu0 %v81
    %296 = vmatprep.subr.mxu0 0.0
    %297 = vmatpush1.msra.mxu0 %v82
    %298 = vmatprep.subr.mxu0 0.0
    %299 = vmatpush1.msra.mxu0 %v83
    %300 = vmatprep.subr.mxu0 0.0
    %301 = vmatpush1.msra.mxu0 %v84
    %302 = vmatprep.subr.mxu0 0.0
    %303 = vmatpush1.msra.mxu0 %v85
    %304 = vmatprep.subr.mxu0 0.0
    %305 = vmatpush1.msra.mxu0 %v86
    %306 = vmatprep.mubr.f32.mxu0 %v146
    %307 = vmatmul.mubr.f32.gmra.mrb[0].mxu0 %v144
    %v308 = vpop.f32.mrb[0].mxu0
    %v309 = vadd.f32 %v239, %v308
    %v310 = vpop.f32.mrb[0].mxu0
    %311 = vdwg.mxu0
    %312 = vmatprep.subr.mxu0 0.0
    %313 = vmatpush1.msra.mxu0 %v87
    %314 = vmatprep.subr.mxu0 0.0
    %315 = vmatpush1.msra.mxu0 %v88
    %316 = vmatprep.subr.mxu0 0.0
    %317 = vmatpush1.msra.mxu0 %v89
    %318 = vmatprep.subr.mxu0 0.0
    %319 = vmatpush1.msra.mxu0 %v90
    %320 = vmatprep.subr.mxu0 0.0
    %321 = vmatpush1.msra.mxu0 %v91
    %322 = vmatprep.subr.mxu0 0.0
    %323 = vmatpush1.msra.mxu0 %v92
    %324 = vmatprep.subr.mxu0 0.0
    %325 = vmatpush1.msra.mxu0 %v93
    %326 = vmatprep.subr.mxu0 0.0
    %327 = vmatpush1.msra.mxu0 %v94
    %328 = vmatprep.subr.mxu0 0.0
    %329 = vmatpush1.msra.mxu0 %v95
    %330 = vmatprep.subr.mxu0 0.0
    %331 = vmatpush1.msra.mxu0 %v96
    %332 = vmatprep.subr.mxu0 0.0
    %333 = vmatpush1.msra.mxu0 %v97
    %334 = vmatprep.subr.mxu0 0.0
    %335 = vmatpush1.msra.mxu0 %v98
    %336 = vmatprep.subr.mxu0 0.0
    %337 = vmatpush1.msra.mxu0 %v99
    %338 = vmatprep.subr.mxu0 0.0
    %339 = vmatpush1.msra.mxu0 %v100
    %340 = vmatprep.subr.mxu0 0.0
    %341 = vmatpush1.msra.mxu0 %v101
    %342 = vmatprep.subr.mxu0 0.0
    %343 = vmatpush1.msra.mxu0 %v102
    %344 = vmatprep.subr.mxu0 0.0
    %345 = vmatpush1.msra.mxu0 %v103
    %346 = vmatprep.subr.mxu0 0.0
    %347 = vmatpush1.msra.mxu0 %v104
    %348 = vmatprep.subr.mxu0 0.0
    %349 = vmatpush1.msra.mxu0 %v105
    %350 = vmatprep.subr.mxu0 0.0
    %351 = vmatpush1.msra.mxu0 %v106
    %352 = vmatprep.subr.mxu0 0.0
    %353 = vmatpush1.msra.mxu0 %v107
    %354 = vmatprep.subr.mxu0 0.0
    %355 = vmatpush1.msra.mxu0 %v108
    %356 = vmatprep.subr.mxu0 0.0
    %357 = vmatpush1.msra.mxu0 %v109
    %358 = vmatprep.subr.mxu0 0.0
    %359 = vmatpush1.msra.mxu0 %v110
    %360 = vmatprep.subr.mxu0 0.0
    %361 = vmatpush1.msra.mxu0 %v111
    %362 = vmatprep.subr.mxu0 0.0
    %363 = vmatpush1.msra.mxu0 %v112
    %364 = vmatprep.subr.mxu0 0.0
    %365 = vmatpush1.msra.mxu0 %v113
    %366 = vmatprep.subr.mxu0 0.0
    %367 = vmatpush1.msra.mxu0 %v114
    %368 = vmatprep.subr.mxu0 0.0
    %369 = vmatpush1.msra.mxu0 %v115
    %370 = vmatprep.subr.mxu0 0.0
    %371 = vmatpush1.msra.mxu0 %v116
    %372 = vmatprep.subr.mxu0 0.0
    %373 = vmatpush1.msra.mxu0 %v117
    %374 = vmatprep.subr.mxu0 0.0
    %375 = vmatpush1.msra.mxu0 %v118
    %376 = vmatprep.mubr.f32.mxu0 %v162
    %377 = vmatmul.mubr.f32.gmra.mrb[0].mxu0 %v154
    %v378 = vpop.f32.mrb[0].mxu0
    %v379 = vadd.f32 %v309, %v378
    %v380 = vpop.f32.mrb[0].mxu0
    %381 = vdwg.mxu0
    %382 = vmatprep.subr.mxu0 0.0
    %383 = vmatpush1.msra.mxu0 %v119
    %384 = vmatprep.subr.mxu0 0.0
    %385 = vmatpush1.msra.mxu0 %v120
    %386 = vmatprep.subr.mxu0 0.0
    %387 = vmatpush1.msra.mxu0 0.0
    %388 = vmatprep.subr.mxu0 0.0
    %389 = vmatpush1.msra.mxu0 0.0
    %390 = vmatprep.subr.mxu0 0.0
    %391 = vmatpush1.msra.mxu0 0.0
    %392 = vmatprep.subr.mxu0 0.0
    %393 = vmatpush1.msra.mxu0 0.0
    %394 = vmatprep.subr.mxu0 0.0
    %395 = vmatpush1.msra.mxu0 0.0
    %396 = vmatprep.subr.mxu0 0.0
    %397 = vmatpush1.msra.mxu0 0.0
    %398 = vmatprep.subr.mxu0 0.0
    %399 = vmatpush1.msra.mxu0 0.0
    %400 = vmatprep.subr.mxu0 0.0
    %401 = vmatpush1.msra.mxu0 0.0
    %402 = vmatprep.subr.mxu0 0.0
    %403 = vmatpush1.msra.mxu0 0.0
    %404 = vmatprep.subr.mxu0 0.0
    %405 = vmatpush1.msra.mxu0 0.0
    %406 = vmatprep.subr.mxu0 0.0
    %407 = vmatpush1.msra.mxu0 0.0
    %408 = vmatprep.subr.mxu0 0.0
    %409 = vmatpush1.msra.mxu0 0.0
    %410 = vmatprep.subr.mxu0 0.0
    %411 = vmatpush1.msra.mxu0 0.0
    %412 = vmatprep.subr.mxu0 0.0
    %413 = vmatpush1.msra.mxu0 0.0
    %414 = vmatprep.subr.mxu0 0.0
    %415 = vmatpush1.msra.mxu0 0.0
    %416 = vmatprep.subr.mxu0 0.0
    %417 = vmatpush1.msra.mxu0 0.0
    %418 = vmatprep.subr.mxu0 0.0
    %419 = vmatpush1.msra.mxu0 0.0
    %420 = vmatprep.subr.mxu0 0.0
    %421 = vmatpush1.msra.mxu0 0.0
    %422 = vmatprep.subr.mxu0 0.0
    %423 = vmatpush1.msra.mxu0 0.0
    %424 = vmatprep.subr.mxu0 0.0
    %425 = vmatpush1.msra.mxu0 0.0
    %426 = vmatprep.subr.mxu0 0.0
    %427 = vmatpush1.msra.mxu0 0.0
    %428 = vmatprep.subr.mxu0 0.0
    %429 = vmatpush1.msra.mxu0 0.0
    %430 = vmatprep.subr.mxu0 0.0
    %431 = vmatpush1.msra.mxu0 0.0
    %432 = vmatprep.subr.mxu0 0.0
    %433 = vmatpush1.msra.mxu0 0.0
    %434 = vmatprep.subr.mxu0 0.0
    %435 = vmatpush1.msra.mxu0 0.0
    %436 = vmatprep.subr.mxu0 0.0
    %437 = vmatpush1.msra.mxu0 0.0
    %438 = vmatprep.subr.mxu0 0.0
    %439 = vmatpush1.msra.mxu0 0.0
    %440 = vmatprep.subr.mxu0 0.0
    %441 = vmatpush1.msra.mxu0 0.0
    %442 = vmatprep.subr.mxu0 0.0
    %443 = vmatpush1.msra.mxu0 0.0
    %444 = vmatprep.subr.mxu0 0.0
    %445 = vmatpush1.msra.mxu0 0.0
    %446 = vmatprep.mubr.f32.mxu0 0.0
    %447 = vmatmul.mubr.f32.gmra.mrb[0].mxu0 %v170
    %v448 = vpop.f32.mrb[0].mxu0
    %v449 = vadd.f32 %v379, %v448
    %v450 = vpop.f32.mrb[0].mxu0
    %451 = vdwg.mxu0
    %v452 = vmax.f32 %v449, 0.0
    %v453 = vld [vmem:[%s3] sm:$0xff]
    %v454 = vld [vmem:[%s3 + $0x8] sm:$0xff]
    %v455 = vld [vmem:[%s3 + $0x10] sm:$0xff]
    %v456 = vld [vmem:[%s3 + $0x18] sm:$0xff]
    %v457 = vld [vmem:[%s3 + $0x20] sm:$0xff]
    %v458 = vld [vmem:[%s3 + $0x28] sm:$0xff]
    %v459 = vld [vmem:[%s3 + $0x30] sm:$0xff]
    %v460 = vld [vmem:[%s3 + $0x38] sm:$0xff]
    %v461 = vld [vmem:[%s3 + $0x40] sm:$0xff]
    %v462 = vld [vmem:[%s3 + $0x48] sm:$0xff]
    %v463 = vld [vmem:[%s3 + $0x50] sm:$0xff]
    %v464 = vld [vmem:[%s3 + $0x58] sm:$0xff]
    %v465 = vld [vmem:[%s3 + $0x60] sm:$0xff]
    %v466 = vld [vmem:[%s3 + $0x68] sm:$0xff]
    %v467 = vld [vmem:[%s3 + $0x70] sm:$0xff]
    %v468 = vld [vmem:[%s3 + $0x78] sm:$0xff]
    %v469 = vld [vmem:[%s3 + $0x80] sm:$0xff]
    %v470 = vld [vmem:[%s3 + $0x88] sm:$0xff]
    %v471 = vld [vmem:[%s3 + $0x90] sm:$0xff]
    %v472 = vld [vmem:[%s3 + $0x98] sm:$0xff]
    %v473 = vld [vmem:[%s3 + $0xa0] sm:$0xff]
    %v474 = vld [vmem:[%s3 + $0xa8] sm:$0xff]
    %v475 = vld [vmem:[%s3 + $0xb0] sm:$0xff]
    %v476 = vld [vmem:[%s3 + $0xb8] sm:$0xff]
    %v477 = vld [vmem:[%s3 + $0xc0] sm:$0xff]
    %v478 = vld [vmem:[%s3 + $0xc8] sm:$0xff]
    %v479 = vld [vmem:[%s3 + $0xd0] sm:$0xff]
    %v480 = vld [vmem:[%s3 + $0xd8] sm:$0xff]
    %v481 = vld [vmem:[%s3 + $0xe0] sm:$0xff]
    %v482 = vld [vmem:[%s3 + $0xe8] sm:$0xff]
    %v483 = vld [vmem:[%s3 + $0xf0] sm:$0xff]
    %v484 = vld [vmem:[%s3 + $0xf8] sm:$0xff]
    %v485 = vld [vmem:[%s3 + $0x100] sm:$0xff]
    %v486 = vld [vmem:[%s3 + $0x108] sm:$0xff]
    %v487 = vld [vmem:[%s3 + $0x110] sm:$0xff]
    %v488 = vld [vmem:[%s3 + $0x118] sm:$0xff]
    %v489 = vld [vmem:[%s3 + $0x120] sm:$0xff]
    %v490 = vld [vmem:[%s3 + $0x128] sm:$0xff]
    %v491 = vld [vmem:[%s3 + $0x130] sm:$0xff]
    %v492 = vld [vmem:[%s3 + $0x138] sm:$0xff]
    %v493 = vld [vmem:[%s3 + $0x140] sm:$0xff]
    %v494 = vld [vmem:[%s3 + $0x148] sm:$0xff]
    %v495 = vld [vmem:[%s3 + $0x150] sm:$0xff]
    %v496 = vld [vmem:[%s3 + $0x158] sm:$0xff]
    %v497 = vld [vmem:[%s3 + $0x160] sm:$0xff]
    %v498 = vld [vmem:[%s3 + $0x168] sm:$0xff]
    %v499 = vld [vmem:[%s3 + $0x170] sm:$0xff]
    %v500 = vld [vmem:[%s3 + $0x178] sm:$0xff]
    %v501 = vld [vmem:[%s3 + $0x180] sm:$0xff]
    %v502 = vld [vmem:[%s3 + $0x188] sm:$0xff]
    %v503 = vld [vmem:[%s3 + $0x190] sm:$0xff]
    %v504 = vld [vmem:[%s3 + $0x198] sm:$0xff]
    %v505 = vld [vmem:[%s3 + $0x1a0] sm:$0xff]
    %v506 = vld [vmem:[%s3 + $0x1a8] sm:$0xff]
    %v507 = vld [vmem:[%s3 + $0x1b0] sm:$0xff]
    %v508 = vld [vmem:[%s3 + $0x1b8] sm:$0xff]
    %v509 = vld [vmem:[%s3 + $0x1c0] sm:$0xff]
    %v510 = vld [vmem:[%s3 + $0x1c8] sm:$0xff]
    %v511 = vld [vmem:[%s3 + $0x1d0] sm:$0xff]
    %v512 = vld [vmem:[%s3 + $0x1d8] sm:$0xff]
    %v513 = vld [vmem:[%s3 + $0x1e0] sm:$0xff]
    %v514 = vld [vmem:[%s3 + $0x1e8] sm:$0xff]
    %v515 = vld [vmem:[%s3 + $0x1f0] sm:$0xff]
    %v516 = vld [vmem:[%s3 + $0x1f8] sm:$0xff]
    %v517 = vld [vmem:[%s3 + $0x200] sm:$0xff]
    %v518 = vld [vmem:[%s3 + $0x208] sm:$0xff]
    %v519 = vld [vmem:[%s3 + $0x210] sm:$0xff]
    %v520 = vld [vmem:[%s3 + $0x218] sm:$0xff]
    %v521 = vld [vmem:[%s3 + $0x220] sm:$0xff]
    %v522 = vld [vmem:[%s3 + $0x228] sm:$0xff]
    %v523 = vld [vmem:[%s3 + $0x230] sm:$0xff]
    %v524 = vld [vmem:[%s3 + $0x238] sm:$0xff]
    %v525 = vld [vmem:[%s3 + $0x240] sm:$0xff]
    %v526 = vld [vmem:[%s3 + $0x248] sm:$0xff]
    %v527 = vld [vmem:[%s3 + $0x250] sm:$0xff]
    %v528 = vld [vmem:[%s3 + $0x258] sm:$0xff]
    %v529 = vld [vmem:[%s3 + $0x260] sm:$0xff]
    %v530 = vld [vmem:[%s3 + $0x268] sm:$0xff]
    %v531 = vld [vmem:[%s3 + $0x270] sm:$0xff]
    %v532 = vld [vmem:[%s3 + $0x278] sm:$0xff]
    %v533 = vld [vmem:[%s3 + $0x280] sm:$0xff]
    %v534 = vld [vmem:[%s3 + $0x288] sm:$0xff]
    %v535 = vld [vmem:[%s3 + $0x290] sm:$0xff]
    %v536 = vld [vmem:[%s3 + $0x298] sm:$0xff]
    %v537 = vld [vmem:[%s3 + $0x2a0] sm:$0xff]
    %v538 = vld [vmem:[%s3 + $0x2a8] sm:$0xff]
    %v539 = vld [vmem:[%s3 + $0x2b0] sm:$0xff]
    %v540 = vld [vmem:[%s3 + $0x2b8] sm:$0xff]
    %v541 = vld [vmem:[%s3 + $0x2c0] sm:$0xff]
    %v542 = vld [vmem:[%s3 + $0x2c8] sm:$0xff]
    %v543 = vld [vmem:[%s3 + $0x2d0] sm:$0xff]
    %v544 = vld [vmem:[%s3 + $0x2d8] sm:$0xff]
    %v545 = vld [vmem:[%s3 + $0x2e0] sm:$0xff]
    %v546 = vld [vmem:[%s3 + $0x2e8] sm:$0xff]
    %v547 = vld [vmem:[%s3 + $0x2f0] sm:$0xff]
    %v548 = vld [vmem:[%s3 + $0x2f8] sm:$0xff]
    %v549 = vld [vmem:[%s3 + $0x300] sm:$0xff]
    %v550 = vld [vmem:[%s3 + $0x308] sm:$0xff]
    %v551 = vld [vmem:[%s3 + $0x310] sm:$0xff]
    %v552 = vld [vmem:[%s3 + $0x318] sm:$0xff]
    %v553 = vld [vmem:[%s3 + $0x320] sm:$0xff]
    %v554 = vld [vmem:[%s3 + $0x328] sm:$0xff]
    %v555 = vld [vmem:[%s3 + $0x330] sm:$0xff]
    %v556 = vld [vmem:[%s3 + $0x338] sm:$0xff]
    %v557 = vld [vmem:[%s3 + $0x340] sm:$0xff]
    %v558 = vld [vmem:[%s3 + $0x348] sm:$0xff]
    %v559 = vld [vmem:[%s3 + $0x350] sm:$0xff]
    %v560 = vld [vmem:[%s3 + $0x358] sm:$0xff]
    %v561 = vld [vmem:[%s3 + $0x360] sm:$0xff]
    %v562 = vld [vmem:[%s3 + $0x368] sm:$0xff]
    %v563 = vld [vmem:[%s3 + $0x370] sm:$0xff]
    %v564 = vld [vmem:[%s3 + $0x378] sm:$0xff]
    %v565 = vld [vmem:[%s4] sm:$0x7f]
    %v567 = vlaneseq
    %v568 = vshrl.u32 %v567, 7
    %v569 = vsub.s32 0, %v568
    %v570 = vrot.slane %v565, %v569
    %v571 = vlaneseq
    %v572 = vshrl.u32 %v571, 7
    %v573 = vsub.s32 1, %v572
    %v574 = vrot.slane %v565, %v573
    %v575 = vlaneseq
    %v576 = vshrl.u32 %v575, 7
    %v577 = vsub.s32 2, %v576
    %v578 = vrot.slane %v565, %v577
    %v579 = vlaneseq
    %v580 = vshrl.u32 %v579, 7
    %v581 = vsub.s32 3, %v580
    %v582 = vrot.slane %v565, %v581
    %v583 = vlaneseq
    %v584 = vshrl.u32 %v583, 7
    %v585 = vsub.s32 4, %v584
    %v586 = vrot.slane %v565, %v585
    %v587 = vlaneseq
    %v588 = vshrl.u32 %v587, 7
    %v589 = vsub.s32 5, %v588
    %v590 = vrot.slane %v565, %v589
    %v591 = vlaneseq
    %v592 = vshrl.u32 %v591, 7
    %v593 = vsub.s32 6, %v592
    %v594 = vrot.slane %v565, %v593
    %602 = vmatprep.subr.mxu0 %v454
    %603 = vmatpush1.msra.mxu0 %v453
    %604 = vmatprep.subr.mxu0 %v461
    %605 = vmatpush1.msra.mxu0 %v460
    %606 = vmatprep.subr.mxu0 %v468
    %607 = vmatpush1.msra.mxu0 %v467
    %608 = vmatprep.subr.mxu0 %v475
    %609 = vmatpush1.msra.mxu0 %v474
    %610 = vmatprep.subr.mxu0 %v482
    %611 = vmatpush1.msra.mxu0 %v481
    %612 = vmatprep.subr.mxu0 %v489
    %613 = vmatpush1.msra.mxu0 %v488
    %614 = vmatprep.subr.mxu0 %v496
    %615 = vmatpush1.msra.mxu0 %v495
    %616 = vmatprep.subr.mxu0 %v503
    %617 = vmatpush1.msra.mxu0 %v502
    %618 = vmatprep.subr.mxu0 %v510
    %619 = vmatpush1.msra.mxu0 %v509
    %620 = vmatprep.subr.mxu0 %v517
    %621 = vmatpush1.msra.mxu0 %v516
    %622 = vmatprep.subr.mxu0 %v524
    %623 = vmatpush1.msra.mxu0 %v523
    %624 = vmatprep.subr.mxu0 %v531
    %625 = vmatpush1.msra.mxu0 %v530
    %626 = vmatprep.subr.mxu0 %v538
    %627 = vmatpush1.msra.mxu0 %v537
    %628 = vmatprep.subr.mxu0 %v545
    %629 = vmatpush1.msra.mxu0 %v544
    %630 = vmatprep.subr.mxu0 %v552
    %631 = vmatpush1.msra.mxu0 %v551
    %632 = vmatprep.subr.mxu0 %v559
    %633 = vmatpush1.msra.mxu0 %v558
    %634 = vmatprep.subr.mxu0 0.0
    %635 = vmatpush1.msra.mxu0 0.0
    %636 = vmatprep.subr.mxu0 0.0
    %637 = vmatpush1.msra.mxu0 0.0
    %638 = vmatprep.subr.mxu0 0.0
    %639 = vmatpush1.msra.mxu0 0.0
    %640 = vmatprep.subr.mxu0 0.0
    %641 = vmatpush1.msra.mxu0 0.0
    %642 = vmatprep.subr.mxu0 0.0
    %643 = vmatpush1.msra.mxu0 0.0
    %644 = vmatprep.subr.mxu0 0.0
    %645 = vmatpush1.msra.mxu0 0.0
    %646 = vmatprep.subr.mxu0 0.0
    %647 = vmatpush1.msra.mxu0 0.0
    %648 = vmatprep.subr.mxu0 0.0
    %649 = vmatpush1.msra.mxu0 0.0
    %650 = vmatprep.subr.mxu0 0.0
    %651 = vmatpush1.msra.mxu0 0.0
    %652 = vmatprep.subr.mxu0 0.0
    %653 = vmatpush1.msra.mxu0 0.0
    %654 = vmatprep.subr.mxu0 0.0
    %655 = vmatpush1.msra.mxu0 0.0
    %656 = vmatprep.subr.mxu0 0.0
    %657 = vmatpush1.msra.mxu0 0.0
    %658 = vmatprep.subr.mxu0 0.0
    %659 = vmatpush1.msra.mxu0 0.0
    %660 = vmatprep.subr.mxu0 0.0
    %661 = vmatpush1.msra.mxu0 0.0
    %662 = vmatprep.subr.mxu0 0.0
    %663 = vmatpush1.msra.mxu0 0.0
    %664 = vmatprep.subr.mxu0 0.0
    %665 = vmatpush1.msra.mxu0 0.0
    %666 = vmatprep.mubr.f32.mxu0 0.0
    %667 = vmatmul.mubr.f32.gmra.mrb[0].mxu0 %v452
    %v668 = vpop.f32.mrb[0].mxu0
    %v669 = vadd.f32 %v570, %v668
    %v670 = vpop.f32.mrb[0].mxu0
    %v671 = vadd.f32 %v574, %v670
    %672 = vdwg.mxu0
    %673 = vmatprep.subr.mxu0 %v456
    %674 = vmatpush1.msra.mxu0 %v455
    %675 = vmatprep.subr.mxu0 %v463
    %676 = vmatpush1.msra.mxu0 %v462
    %677 = vmatprep.subr.mxu0 %v470
    %678 = vmatpush1.msra.mxu0 %v469
    %679 = vmatprep.subr.mxu0 %v477
    %680 = vmatpush1.msra.mxu0 %v476
    %681 = vmatprep.subr.mxu0 %v484
    %682 = vmatpush1.msra.mxu0 %v483
    %683 = vmatprep.subr.mxu0 %v491
    %684 = vmatpush1.msra.mxu0 %v490
    %685 = vmatprep.subr.mxu0 %v498
    %686 = vmatpush1.msra.mxu0 %v497
    %687 = vmatprep.subr.mxu0 %v505
    %688 = vmatpush1.msra.mxu0 %v504
    %689 = vmatprep.subr.mxu0 %v512
    %690 = vmatpush1.msra.mxu0 %v511
    %691 = vmatprep.subr.mxu0 %v519
    %692 = vmatpush1.msra.mxu0 %v518
    %693 = vmatprep.subr.mxu0 %v526
    %694 = vmatpush1.msra.mxu0 %v525
    %695 = vmatprep.subr.mxu0 %v533
    %696 = vmatpush1.msra.mxu0 %v532
    %697 = vmatprep.subr.mxu0 %v540
    %698 = vmatpush1.msra.mxu0 %v539
    %699 = vmatprep.subr.mxu0 %v547
    %700 = vmatpush1.msra.mxu0 %v546
    %701 = vmatprep.subr.mxu0 %v554
    %702 = vmatpush1.msra.mxu0 %v553
    %703 = vmatprep.subr.mxu0 %v561
    %704 = vmatpush1.msra.mxu0 %v560
    %705 = vmatprep.subr.mxu0 0.0
    %706 = vmatpush1.msra.mxu0 0.0
    %707 = vmatprep.subr.mxu0 0.0
    %708 = vmatpush1.msra.mxu0 0.0
    %709 = vmatprep.subr.mxu0 0.0
    %710 = vmatpush1.msra.mxu0 0.0
    %711 = vmatprep.subr.mxu0 0.0
    %712 = vmatpush1.msra.mxu0 0.0
    %713 = vmatprep.subr.mxu0 0.0
    %714 = vmatpush1.msra.mxu0 0.0
    %715 = vmatprep.subr.mxu0 0.0
    %716 = vmatpush1.msra.mxu0 0.0
    %717 = vmatprep.subr.mxu0 0.0
    %718 = vmatpush1.msra.mxu0 0.0
    %719 = vmatprep.subr.mxu0 0.0
    %720 = vmatpush1.msra.mxu0 0.0
    %721 = vmatprep.subr.mxu0 0.0
    %722 = vmatpush1.msra.mxu0 0.0
    %723 = vmatprep.subr.mxu0 0.0
    %724 = vmatpush1.msra.mxu0 0.0
    %725 = vmatprep.subr.mxu0 0.0
    %726 = vmatpush1.msra.mxu0 0.0
    %727 = vmatprep.subr.mxu0 0.0
    %728 = vmatpush1.msra.mxu0 0.0
    %729 = vmatprep.subr.mxu0 0.0
    %730 = vmatpush1.msra.mxu0 0.0
    %731 = vmatprep.subr.mxu0 0.0
    %732 = vmatpush1.msra.mxu0 0.0
    %733 = vmatprep.subr.mxu0 0.0
    %734 = vmatpush1.msra.mxu0 0.0
    %735 = vmatprep.subr.mxu0 0.0
    %736 = vmatpush1.msra.mxu0 0.0
    %737 = vmatprep.mubr.f32.mxu0 0.0
    %738 = vmatmul.mubr.f32.gmra.mrb[0].mxu0 %v452
    %v739 = vpop.f32.mrb[0].mxu0
    %v740 = vadd.f32 %v578, %v739
    %v741 = vpop.f32.mrb[0].mxu0
    %v742 = vadd.f32 %v582, %v741
    %743 = vdwg.mxu0
    %744 = vmatprep.subr.mxu0 %v458
    %745 = vmatpush1.msra.mxu0 %v457
    %746 = vmatprep.subr.mxu0 %v465
    %747 = vmatpush1.msra.mxu0 %v464
    %748 = vmatprep.subr.mxu0 %v472
    %749 = vmatpush1.msra.mxu0 %v471
    %750 = vmatprep.subr.mxu0 %v479
    %751 = vmatpush1.msra.mxu0 %v478
    %752 = vmatprep.subr.mxu0 %v486
    %753 = vmatpush1.msra.mxu0 %v485
    %754 = vmatprep.subr.mxu0 %v493
    %755 = vmatpush1.msra.mxu0 %v492
    %756 = vmatprep.subr.mxu0 %v500
    %757 = vmatpush1.msra.mxu0 %v499
    %758 = vmatprep.subr.mxu0 %v507
    %759 = vmatpush1.msra.mxu0 %v506
    %760 = vmatprep.subr.mxu0 %v514
    %761 = vmatpush1.msra.mxu0 %v513
    %762 = vmatprep.subr.mxu0 %v521
    %763 = vmatpush1.msra.mxu0 %v520
    %764 = vmatprep.subr.mxu0 %v528
    %765 = vmatpush1.msra.mxu0 %v527
    %766 = vmatprep.subr.mxu0 %v535
    %767 = vmatpush1.msra.mxu0 %v534
    %768 = vmatprep.subr.mxu0 %v542
    %769 = vmatpush1.msra.mxu0 %v541
    %770 = vmatprep.subr.mxu0 %v549
    %771 = vmatpush1.msra.mxu0 %v548
    %772 = vmatprep.subr.mxu0 %v556
    %773 = vmatpush1.msra.mxu0 %v555
    %774 = vmatprep.subr.mxu0 %v563
    %775 = vmatpush1.msra.mxu0 %v562
    %776 = vmatprep.subr.mxu0 0.0
    %777 = vmatpush1.msra.mxu0 0.0
    %778 = vmatprep.subr.mxu0 0.0
    %779 = vmatpush1.msra.mxu0 0.0
    %780 = vmatprep.subr.mxu0 0.0
    %781 = vmatpush1.msra.mxu0 0.0
    %782 = vmatprep.subr.mxu0 0.0
    %783 = vmatpush1.msra.mxu0 0.0
    %784 = vmatprep.subr.mxu0 0.0
    %785 = vmatpush1.msra.mxu0 0.0
    %786 = vmatprep.subr.mxu0 0.0
    %787 = vmatpush1.msra.mxu0 0.0
    %788 = vmatprep.subr.mxu0 0.0
    %789 = vmatpush1.msra.mxu0 0.0
    %790 = vmatprep.subr.mxu0 0.0
    %791 = vmatpush1.msra.mxu0 0.0
    %792 = vmatprep.subr.mxu0 0.0
    %793 = vmatpush1.msra.mxu0 0.0
    %794 = vmatprep.subr.mxu0 0.0
    %795 = vmatpush1.msra.mxu0 0.0
    %796 = vmatprep.subr.mxu0 0.0
    %797 = vmatpush1.msra.mxu0 0.0
    %798 = vmatprep.subr.mxu0 0.0
    %799 = vmatpush1.msra.mxu0 0.0
    %800 = vmatprep.subr.mxu0 0.0
    %801 = vmatpush1.msra.mxu0 0.0
    %802 = vmatprep.subr.mxu0 0.0
    %803 = vmatpush1.msra.mxu0 0.0
    %804 = vmatprep.subr.mxu0 0.0
    %805 = vmatpush1.msra.mxu0 0.0
    %806 = vmatprep.subr.mxu0 0.0
    %807 = vmatpush1.msra.mxu0 0.0
    %808 = vmatprep.mubr.f32.mxu0 0.0
    %809 = vmatmul.mubr.f32.gmra.mrb[0].mxu0 %v452
    %v810 = vpop.f32.mrb[0].mxu0
    %v811 = vadd.f32 %v586, %v810
    %v812 = vpop.f32.mrb[0].mxu0
    %v813 = vadd.f32 %v590, %v812
    %814 = vdwg.mxu0
    %815 = vmatprep.subr.mxu0 0.0
    %816 = vmatpush1.msra.mxu0 %v459
    %817 = vmatprep.subr.mxu0 0.0
    %818 = vmatpush1.msra.mxu0 %v466
    %819 = vmatprep.subr.mxu0 0.0
    %820 = vmatpush1.msra.mxu0 %v473
    %821 = vmatprep.subr.mxu0 0.0
    %822 = vmatpush1.msra.mxu0 %v480
    %823 = vmatprep.subr.mxu0 0.0
    %824 = vmatpush1.msra.mxu0 %v487
    %825 = vmatprep.subr.mxu0 0.0
    %826 = vmatpush1.msra.mxu0 %v494
    %827 = vmatprep.subr.mxu0 0.0
    %828 = vmatpush1.msra.mxu0 %v501
    %829 = vmatprep.subr.mxu0 0.0
    %830 = vmatpush1.msra.mxu0 %v508
    %831 = vmatprep.subr.mxu0 0.0
    %832 = vmatpush1.msra.mxu0 %v515
    %833 = vmatprep.subr.mxu0 0.0
    %834 = vmatpush1.msra.mxu0 %v522
    %835 = vmatprep.subr.mxu0 0.0
    %836 = vmatpush1.msra.mxu0 %v529
    %837 = vmatprep.subr.mxu0 0.0
    %838 = vmatpush1.msra.mxu0 %v536
    %839 = vmatprep.subr.mxu0 0.0
    %840 = vmatpush1.msra.mxu0 %v543
    %841 = vmatprep.subr.mxu0 0.0
    %842 = vmatpush1.msra.mxu0 %v550
    %843 = vmatprep.subr.mxu0 0.0
    %844 = vmatpush1.msra.mxu0 %v557
    %845 = vmatprep.subr.mxu0 0.0
    %846 = vmatpush1.msra.mxu0 %v564
    %847 = vmatprep.subr.mxu0 0.0
    %848 = vmatpush1.msra.mxu0 0.0
    %849 = vmatprep.subr.mxu0 0.0
    %850 = vmatpush1.msra.mxu0 0.0
    %851 = vmatprep.subr.mxu0 0.0
    %852 = vmatpush1.msra.mxu0 0.0
    %853 = vmatprep.subr.mxu0 0.0
    %854 = vmatpush1.msra.mxu0 0.0
    %855 = vmatprep.subr.mxu0 0.0
    %856 = vmatpush1.msra.mxu0 0.0
    %857 = vmatprep.subr.mxu0 0.0
    %858 = vmatpush1.msra.mxu0 0.0
    %859 = vmatprep.subr.mxu0 0.0
    %860 = vmatpush1.msra.mxu0 0.0
    %861 = vmatprep.subr.mxu0 0.0
    %862 = vmatpush1.msra.mxu0 0.0
    %863 = vmatprep.subr.mxu0 0.0
    %864 = vmatpush1.msra.mxu0 0.0
    %865 = vmatprep.subr.mxu0 0.0
    %866 = vmatpush1.msra.mxu0 0.0
    %867 = vmatprep.subr.mxu0 0.0
    %868 = vmatpush1.msra.mxu0 0.0
    %869 = vmatprep.subr.mxu0 0.0
    %870 = vmatpush1.msra.mxu0 0.0
    %871 = vmatprep.subr.mxu0 0.0
    %872 = vmatpush1.msra.mxu0 0.0
    %873 = vmatprep.subr.mxu0 0.0
    %874 = vmatpush1.msra.mxu0 0.0
    %875 = vmatprep.subr.mxu0 0.0
    %876 = vmatpush1.msra.mxu0 0.0
    %877 = vmatprep.subr.mxu0 0.0
    %878 = vmatpush1.msra.mxu0 0.0
    %879 = vmatprep.mubr.f32.mxu0 0.0
    %880 = vmatmul.mubr.f32.gmra.mrb[0].mxu0 %v452
    %v881 = vpop.f32.mrb[0].mxu0
    %v882 = vadd.f32 %v594, %v881
    %v883 = vpop.f32.mrb[0].mxu0
    %884 = vdwg.mxu0
    %v885 = vsub.f32 0.0, %v669
    %v886 = vsub.f32 0.0, %v671
    %v887 = vsub.f32 0.0, %v740
    %v888 = vsub.f32 0.0, %v742
    %v889 = vsub.f32 0.0, %v811
    %v890 = vsub.f32 0.0, %v813
    %v891 = vsub.f32 0.0, %v882
    %v892 = vmul.f32 %v885, 1.442695
    %v893 = vpow.pop %v892
    %v894 = vmul.f32 %v886, 1.442695
    %v895 = vpow.pop %v894
    %v896 = vmul.f32 %v887, 1.442695
    %v897 = vpow.pop %v896
    %v898 = vmul.f32 %v888, 1.442695
    %v899 = vpow.pop %v898
    %v900 = vmul.f32 %v889, 1.442695
    %v901 = vpow.pop %v900
    %v902 = vmul.f32 %v890, 1.442695
    %v903 = vpow.pop %v902
    %v904 = vmul.f32 %v891, 1.442695
    %v905 = vpow.pop %v904
    %v906 = vadd.f32 %v893, 1.0
    %v907 = vadd.f32 %v895, 1.0
    %v908 = vadd.f32 %v897, 1.0
    %v909 = vadd.f32 %v899, 1.0
    %v910 = vadd.f32 %v901, 1.0
    %v911 = vadd.f32 %v903, 1.0
    %v912 = vadd.f32 %v905, 1.0
    %v913 = vrcp.pop %v906
    %v914 = vmul.f32 1.0, %v913
    %v915 = vrcp.pop %v907
    %v916 = vmul.f32 1.0, %v915
    %v917 = vrcp.pop %v908
    %v918 = vmul.f32 1.0, %v917
    %v919 = vrcp.pop %v909
    %v920 = vmul.f32 1.0, %v919
    %v921 = vrcp.pop %v910
    %v922 = vmul.f32 1.0, %v921
    %v923 = vrcp.pop %v911
    %v924 = vmul.f32 1.0, %v923
    %v925 = vrcp.pop %v912
    %v926 = vmul.f32 1.0, %v925
    %v934 = vcombine.low %v914, %v916
    %v935 = vcombine.low %v918, %v920
    %v937 = vunpack.c.l.s4 1983009808
    %v938 = vunpack.c.0.s8 %v937
    %v939 = vlaneseq
    %v940 = vshrl.u32 %v939, 7
    %v941 = vsub.s32 %v938, %v940
    %v942 = vrot.slane %v934, %v941
    %v944 = vunpack.c.l.s4 1983009808
    %v945 = vunpack.c.0.s8 %v944
    %v946 = vlaneseq
    %v947 = vshrl.u32 %v946, 7
    %v948 = vsub.s32 %v945, %v947
    %v949 = vrot.slane %v935, %v948
    %v950 = vcombine.low %v942, %v949
    %v951 = vcombine.low %v922, %v924
    %v953 = vunpack.c.l.s4 1983009808
    %v954 = vunpack.c.0.s8 %v953
    %v955 = vlaneseq
    %v956 = vshrl.u32 %v955, 7
    %v957 = vsub.s32 %v954, %v956
    %v958 = vrot.slane %v951, %v957
    %v960 = vunpack.c.l.s4 1983009808
    %v961 = vunpack.c.0.s8 %v960
    %v962 = vlaneseq
    %v963 = vshrl.u32 %v962, 7
    %v964 = vsub.s32 %v961, %v963
    %v965 = vrot.slane %v926, %v964
    %v966 = vcombine.low %v958, %v965
    %969 = vst [vmem:[#allocation2] sm:$0xff] %v950
    %vm970 = vcmask 1041408
    %vm971 = vcmask 1043458
    %vm972 = vmor %vm971, %vm970
    %vm973 = vcmask 128004
    %vm974 = vmor %vm973, %vm972
    %975 = vst.msk [vmem:[#allocation2 + $0x8] sm:$0x3f] %vm974, %v966
    // Predicated region
    $region22: #{tpu_custom_call.1} parent=1 // pred_check
      _
    $region23: #{tpu_custom_call.1} parent=1 // pred_check_branch
      %977 = sbr.rel (0) target = $region25
    $region24: #{tpu_custom_call.1} parent=1 // pred_region
      %s979 = ssub.s32 224, 224
      %980 = vsyncadd [#allocation3], %s979
      %s982 = sshll.u32 [#allocation2], 4
      %s983 = int_to_ptr.vmem [resolvable:$true] %s982
      %985 = dma.vmem_to_hbm [thread:$0]  %s983, 224, %s5, [#allocation3]
    $region25: #{tpu_custom_call.1} parent=1 // pred_fallthru
      _
    // Predicated region
    $region26: #{tpu_custom_call.1} parent=1 // pred_check
      _
    $region27: #{tpu_custom_call.1} parent=1 // pred_check_branch
      %987 = sbr.rel (0) target = $region29
    $region28: #{tpu_custom_call.1} parent=1 // pred_region
      %988 = dma.done [#allocation3], 224
    $region29: #{tpu_custom_call.1} parent=1 // pred_fallthru
      _
    %989 = vsyncpa [#allocation3], 1

</llo_original>
